<compile_context>
chip_gen: v7x
topology: tpu7x:2x2x1
jax: 0.10.0
libtpu: 0.0.40
codegen_flags: <defaults>
</compile_context>

<pallas_src>
import functools

import jax
import jax.numpy as jnp
from jax.experimental import pallas as pl
from jax.experimental.pallas import tpu as pltpu


def _round_up(x, m):
    return (x + m - 1) // m * m


# --------------------------------------------------------------------------- #
# Kernel
# --------------------------------------------------------------------------- #
def _lstm_fc_kernel(x_ref, wih_ref, b_ref, wfc_ref, bfc_ref, out_ref, *, h_pad):
    """Zero-state LSTM cell step ([i|o|g] gates only) + fused lane-dense FC head."""
    x = x_ref[...].astype(wih_ref.dtype)          # in-kernel cast (no extra x pass)

    # (TB, 3*H_pad) gate pre-activations; f32 accumulation on the MXU.
    gates = jnp.dot(x, wih_ref[...], preferred_element_type=jnp.float32) + b_ref[...]

    # One EUP launch over the whole contiguous slab.  The g columns were pre-scaled
    # by 2 at pack time, so tanh(pre_g) == 2 * sigmoid(2 * pre_g) - 1.
    s = jax.nn.sigmoid(gates)
    i_g = s[:, 0 * h_pad:1 * h_pad]
    o_g = s[:, 1 * h_pad:2 * h_pad]
    g_g = 2.0 * s[:, 2 * h_pad:3 * h_pad] - 1.0   # == tanh(pre_g), cheap VPU affine

    # c0 == 0  =>  c = i * g ;  h = o * tanh(c)
    h = o_g * jnp.tanh(i_g * g_g)

    # fc head: (TB, H_pad) @ (H_pad, O_pad) + (1, O_pad) -> lane-dense store.
    out_ref[...] = (
        jnp.dot(h.astype(wfc_ref.dtype), wfc_ref[...],
                preferred_element_type=jnp.float32)
        + bfc_ref[...]
    ).astype(out_ref.dtype)


# --------------------------------------------------------------------------- #
# One-time weight packing (keep OUT of the per-step hot path)
# --------------------------------------------------------------------------- #
def pack_lstm_params(params, *, mxu_dtype=jnp.float32):
    """Pre-pack LSTM + FC weights for the fused kernel.  Call once, reuse.

    mxu_dtype=jnp.bfloat16 halves weight HBM traffic on every TPU generation
    (v5e/v6e/v7x MXUs all take bf16 natively); gate math stays f32 either way.
    """
    w_ih, w_hh = params["w_ih"], params["w_hh"]
    b_ih, b_hh = params["b_ih"], params["b_hh"]
    w_fc, b_fc = params["w_fc"], params["b_fc"]

    H = w_hh.shape[1]
    D = w_ih.shape[1]
    O = w_fc.shape[0]
    H_pad = _round_up(H, 128)
    O_pad = _round_up(O, 128)
    # TODO(synk): for peak v6e/v7x MXU utilisation also round D up to 256 when the
    # surrounding model can hand the kernel a pre-padded x.

    b = b_ih + b_hh
    # PyTorch nn.LSTM row layout: [i | f | g | o]; f is dropped (it only scales c0 == 0).
    w_i, b_i = w_ih[0 * H:1 * H], b[0 * H:1 * H]
    w_g, b_g = w_ih[2 * H:3 * H], b[2 * H:3 * H]
    w_o, b_o = w_ih[3 * H:4 * H], b[3 * H:4 * H]

    wih_t = jnp.zeros((D, 3 * H_pad), jnp.float32)
    wih_t = wih_t.at[:, 0 * H_pad:0 * H_pad + H].set(w_i.T)
    wih_t = wih_t.at[:, 1 * H_pad:1 * H_pad + H].set(w_o.T)
    wih_t = wih_t.at[:, 2 * H_pad:2 * H_pad + H].set(2.0 * w_g.T)     # folded 2x
    bias = jnp.zeros((1, 3 * H_pad), jnp.float32)
    bias = bias.at[:, 0 * H_pad:0 * H_pad + H].set(b_i[None, :])
    bias = bias.at[:, 1 * H_pad:1 * H_pad + H].set(b_o[None, :])
    bias = bias.at[:, 2 * H_pad:2 * H_pad + H].set(2.0 * b_g[None, :])

    wfc_t = jnp.zeros((H_pad, O_pad), jnp.float32).at[:H, :O].set(w_fc.T)
    bfc = jnp.zeros((1, O_pad), jnp.float32).at[:, :O].set(b_fc[None, :])

    return {
        "wih_t": wih_t.astype(mxu_dtype),   # (D, 3*H_pad)
        "bias": bias,                        # (1, 3*H_pad) f32
        "wfc_t": wfc_t.astype(mxu_dtype),   # (H_pad, O_pad)
        "bfc": bfc,                          # (1, O_pad) f32
        "dims": (D, H, H_pad, O, O_pad),
    }


# --------------------------------------------------------------------------- #
# Tile selection
# --------------------------------------------------------------------------- #
def _choose_batch_tile(batch, per_row_bytes, align, batch_tile=None,
                       vmem_budget_bytes=24 * 1024 * 1024):
    """Sublane-aligned batch tile sized from a VMEM budget; returns (tile, steps)."""
    cap = (vmem_budget_bytes // max(per_row_bytes, 1)) // align * align
    cap = max(align, min(4096, cap))
    if batch_tile is not None:
        cap = max(align, min(cap, (batch_tile // align) * align))
    if batch <= cap:
        if batch >= 4 * align:
            # >= 2 grid steps: v7x megacore sharding + pipelined x/out streams.
            tile = _round_up(pl.cdiv(batch, 2), align)
            return tile, pl.cdiv(batch, tile)
        return batch, 1            # single block == full array dim (no alignment needed)
    return cap, pl.cdiv(batch, cap)


# --------------------------------------------------------------------------- #
# Forward wrapper
# --------------------------------------------------------------------------- #
def lstm_classifier_forward(x, packed, *, batch_tile=None):
    """x: (B, input_dim) -> (B, output_dim) float32.  `packed` from pack_lstm_params.

    NOTE: the fused single-cell-step form is only valid for this module's forward
    (seq_len == 1, default zero (h0, c0)); do not reuse for longer sequences or
    user-provided states.
    """
    assert x.ndim == 2, "LSTMClassifier forward expects (batch, input_dim)"

    D, H, H_pad, O, O_pad = packed["dims"]
    B, Dx = x.shape
    assert Dx == D, f"input_dim mismatch: {Dx} vs packed {D}"

    wih_t, bias = packed["wih_t"], packed["bias"]
    wfc_t, bfc = packed["wfc_t"], packed["bfc"]
    w_bytes = jnp.dtype(wih_t.dtype).itemsize
    x_bytes = jnp.dtype(x.dtype).itemsize
    align = 16 if x_bytes == 2 else 8          # sublane packing of the streamed x tile

    # VMEM per batch row: double-buffered x + double-buffered out + f32 intermediates.
    per_row = 2 * D * x_bytes + 2 * O_pad * 4 + (3 * H_pad + 2 * H_pad) * 4
    TB, steps = _choose_batch_tile(B, per_row, align, batch_tile)

    cost = pl.CostEstimate(
        flops=2 * B * (D * 3 * H_pad + H_pad * O_pad),
        transcendentals=B * 4 * H_pad,                       # sigmoid slab + tanh(c)
        bytes_accessed=(B * D * x_bytes + B * O_pad * 4
                        + D * 3 * H_pad * w_bytes + H_pad * O_pad * w_bytes
                        + 3 * H_pad * 4 + O_pad * 4),
    )

    kernel = functools.partial(_lstm_fc_kernel, h_pad=H_pad)
    resident = pl.Buffered(1)     # constant-index blocks: fetched once, single buffer

    out = pl.pallas_call(
        kernel,
        out_shape=jax.ShapeDtypeStruct((B, O_pad), jnp.float32),
        grid=(steps,),
        in_specs=[
            pl.BlockSpec((TB, D), lambda i: (i, 0)),                              # x
            pl.BlockSpec((D, 3 * H_pad), lambda i: (0, 0), pipeline_mode=resident),
            pl.BlockSpec((1, 3 * H_pad), lambda i: (0, 0), pipeline_mode=resident),
            pl.BlockSpec((H_pad, O_pad), lambda i: (0, 0), pipeline_mode=resident),
            pl.BlockSpec((1, O_pad), lambda i: (0, 0), pipeline_mode=resident),
        ],
        out_specs=pl.BlockSpec((TB, O_pad), lambda i: (i, 0)),
        compiler_params=pltpu.CompilerParams(
            dimension_semantics=("parallel",),           # megacore batch sharding
            vmem_limit_bytes=48 * 1024 * 1024,
        ),
        cost_estimate=cost,
    )(x, wih_t, bias, wfc_t, bfc)

    # TODO(synk): for tiny O the padded f32 (B, O_pad) writeback dominates HBM
    # writes when D is small; a masked (TB, O) store / bf16 output is worth
    # benchmarking per shape (v6e/v7x have an extra vst slot).
    return out[:, :O]


# --------------------------------------------------------------------------- #
# Reference + init
# --------------------------------------------------------------------------- #
def init_params(key, input_dim, hidden_dim, output_dim):
    """Deterministic init mimicking PyTorch's U(-1/sqrt(H), 1/sqrt(H))."""
    k = jax.random.split(key, 6)
    s = 1.0 / jnp.sqrt(jnp.float32(hidden_dim))
    return {
        "w_ih": jax.random.uniform(k[0], (4 * hidden_dim, input_dim), jnp.float32, -s, s),
        "w_hh": jax.random.uniform(k[1], (4 * hidden_dim, hidden_dim), jnp.float32, -s, s),
        "b_ih": jax.random.uniform(k[2], (4 * hidden_dim,), jnp.float32, -s, s),
        "b_hh": jax.random.uniform(k[3], (4 * hidden_dim,), jnp.float32, -s, s),
        "w_fc": jax.random.uniform(k[4], (output_dim, hidden_dim), jnp.float32, -s, s),
        "b_fc": jax.random.uniform(k[5], (output_dim,), jnp.float32, -s, s),
    }


def _reference_forward(x, params):
    """Pure-JAX reference of the full PyTorch math (all four gates, zero state)."""
    H = params["w_hh"].shape[1]
    gates = x @ params["w_ih"].T + params["b_ih"] + params["b_hh"]
    i = jax.nn.sigmoid(gates[:, 0 * H:1 * H])
    f = jax.nn.sigmoid(gates[:, 1 * H:2 * H])
    g = jnp.tanh(gates[:, 2 * H:3 * H])
    o = jax.nn.sigmoid(gates[:, 3 * H:4 * H])
    c = f * jnp.zeros_like(g) + i * g
    h = o * jnp.tanh(c)
    return h @ params["w_fc"].T + params["b_fc"]


if __name__ == "__main__":
    B, INPUT_DIM, HIDDEN_DIM, OUTPUT_DIM = 2, 16, 32, 4

    key = jax.random.PRNGKey(0)
    k_x, k_x2, k_p = jax.random.split(key, 3)
    x = jax.random.normal(k_x, (B, INPUT_DIM), jnp.float32)
    params = init_params(k_p, INPUT_DIM, HIDDEN_DIM, OUTPUT_DIM)

    # f32 MXU operands: tight-tolerance check against the PyTorch-faithful reference.
    packed_f32 = pack_lstm_params(params, mxu_dtype=jnp.float32)
    ref = _reference_forward(x, params)
    out = jax.block_until_ready(lstm_classifier_forward(x, packed_f32))
    assert out.shape == (B, OUTPUT_DIM)
    assert jnp.allclose(out, ref, atol=1e-4, rtol=1e-4)

    # Multi-tile path (grid > 1, single-buffered resident weights) on a bigger batch.
    x_big = jax.random.normal(k_x2, (64, INPUT_DIM), jnp.float32)
    ref_big = _reference_forward(x_big, params)
    out_big = jax.block_until_ready(lstm_classifier_forward(x_big, packed_f32))
    assert out_big.shape == (64, OUTPUT_DIM)
    assert jnp.allclose(out_big, ref_big, atol=1e-4, rtol=1e-4)

    # bf16 MXU operands (recommended on v5e/v6e/v7x for HBM-bound shapes); gate math
    # stays f32, so only matmul-operand precision changes -> loose tolerance.
    packed_bf16 = pack_lstm_params(params, mxu_dtype=jnp.bfloat16)
    out_bf16 = jax.block_until_ready(lstm_classifier_forward(x_big, packed_bf16))
    assert out_bf16.shape == (64, OUTPUT_DIM)
    assert jnp.allclose(out_bf16, ref_big, atol=1e-1, rtol=1e-1)

    print("KERNEL_OK")
</pallas_src>

<mosaic_0001>
module attributes {stable_mosaic.version = 11 : i64} {
  func.func @_lstm_fc_kernel(%arg0: i32, %arg1: memref<2x16xf32, #tpu.memory_space<vmem>>, %arg2: memref<16x384xf32, #tpu.memory_space<vmem>>, %arg3: memref<1x384xf32, #tpu.memory_space<vmem>>, %arg4: memref<128x128xf32, #tpu.memory_space<vmem>>, %arg5: memref<1x128xf32, #tpu.memory_space<vmem>>, %arg6: memref<2x128xf32, #tpu.memory_space<vmem>>) attributes {dimension_semantics = [#tpu.dimension_semantics<parallel>], iteration_bounds = array<i64: 1>, scalar_prefetch = 0 : i64, scratch_operands = 0 : i64, tpu.core_type = #tpu.core_type<tc>, window_params = [{transform_indices = @transform_0, window_bounds = array<i64: 2, 16>}, {pipeline_mode = #tpu.pipeline_mode<synchronous>, transform_indices = @transform_1, window_bounds = array<i64: 16, 384>}, {pipeline_mode = #tpu.pipeline_mode<synchronous>, transform_indices = @transform_2, window_bounds = array<i64: 1, 384>}, {pipeline_mode = #tpu.pipeline_mode<synchronous>, transform_indices = @transform_3, window_bounds = array<i64: 128, 128>}, {pipeline_mode = #tpu.pipeline_mode<synchronous>, transform_indices = @transform_4, window_bounds = array<i64: 1, 128>}, {transform_indices = @transform_5, window_bounds = array<i64: 2, 128>}]} {
    %c0 = arith.constant 0 : index
    %c0_0 = arith.constant 0 : index
    %0 = vector.load %arg1[%c0, %c0_0] : memref<2x16xf32, #tpu.memory_space<vmem>>, vector<2x16xf32>
    %c0_1 = arith.constant 0 : index
    %c0_2 = arith.constant 0 : index
    %1 = vector.load %arg2[%c0_1, %c0_2] : memref<16x384xf32, #tpu.memory_space<vmem>>, vector<16x384xf32>
    %cst = arith.constant dense<0.000000e+00> : vector<2x384xf32>
    %2 = tpu.matmul %0, %1, %cst {dimension_numbers = #tpu.dot_dimension_numbers<[1], [0], [0], [1], [0, 0, 1, 1], [], []>} : vector<2x16xf32>, vector<16x384xf32>, vector<2x384xf32> -> vector<2x384xf32>
    %c0_3 = arith.constant 0 : index
    %c0_4 = arith.constant 0 : index
    %3 = vector.load %arg3[%c0_3, %c0_4] : memref<1x384xf32, #tpu.memory_space<vmem>>, vector<1x384xf32>
    %4 = vector.broadcast %3 : vector<1x384xf32> to vector<2x384xf32>
    %5 = arith.addf %2, %4 : vector<2x384xf32>
    %6 = arith.negf %5 : vector<2x384xf32>
    %7 = math.exp %6 : vector<2x384xf32>
    %cst_5 = arith.constant 1.000000e+00 : f32
    %8 = vector.broadcast %cst_5 : f32 to vector<2x384xf32>
    %9 = arith.addf %8, %7 : vector<2x384xf32>
    %10 = arith.divf %8, %9 : vector<2x384xf32>
    %11 = vector.extract_strided_slice %10 {offsets = [0, 0], sizes = [2, 128], strides = [1, 1]} : vector<2x384xf32> to vector<2x128xf32>
    %12 = vector.extract_strided_slice %10 {offsets = [0, 128], sizes = [2, 128], strides = [1, 1]} : vector<2x384xf32> to vector<2x128xf32>
    %13 = vector.extract_strided_slice %10 {offsets = [0, 256], sizes = [2, 128], strides = [1, 1]} : vector<2x384xf32> to vector<2x128xf32>
    %cst_6 = arith.constant 2.000000e+00 : f32
    %14 = vector.broadcast %cst_6 : f32 to vector<2x128xf32>
    %15 = arith.mulf %14, %13 : vector<2x128xf32>
    %cst_7 = arith.constant 1.000000e+00 : f32
    %16 = vector.broadcast %cst_7 : f32 to vector<2x128xf32>
    %17 = arith.subf %15, %16 : vector<2x128xf32>
    %18 = arith.mulf %11, %17 : vector<2x128xf32>
    %19 = math.tanh %18 : vector<2x128xf32>
    %20 = arith.mulf %12, %19 : vector<2x128xf32>
    %c0_8 = arith.constant 0 : index
    %c0_9 = arith.constant 0 : index
    %21 = vector.load %arg4[%c0_8, %c0_9] : memref<128x128xf32, #tpu.memory_space<vmem>>, vector<128x128xf32>
    %cst_10 = arith.constant dense<0.000000e+00> : vector<2x128xf32>
    %22 = tpu.matmul %20, %21, %cst_10 {dimension_numbers = #tpu.dot_dimension_numbers<[1], [0], [0], [1], [0, 0, 1, 1], [], []>} : vector<2x128xf32>, vector<128x128xf32>, vector<2x128xf32> -> vector<2x128xf32>
    %c0_11 = arith.constant 0 : index
    %c0_12 = arith.constant 0 : index
    %23 = vector.load %arg5[%c0_11, %c0_12] : memref<1x128xf32, #tpu.memory_space<vmem>>, vector<1x128xf32>
    %24 = vector.broadcast %23 : vector<1x128xf32> to vector<2x128xf32>
    %25 = arith.addf %22, %24 : vector<2x128xf32>
    %c0_13 = arith.constant 0 : index
    %c0_14 = arith.constant 0 : index
    %26 = vector.load %arg6[%c0_13, %c0_14] : memref<2x128xf32, #tpu.memory_space<vmem>>, vector<2x128xf32>
    tpu.vector_store %arg6[%c0_13, %c0_14], %25 {strides = array<i32>} : memref<2x128xf32, #tpu.memory_space<vmem>>, vector<2x128xf32>,
    return
  }
  func.func @transform_0(%arg0: i32) -> (i32, i32) {
    %c0_i32 = arith.constant 0 : i32
    %c0_i32_0 = arith.constant 0 : i32
    return %arg0, %c0_i32 : i32, i32
  }
  func.func @transform_1(%arg0: i32) -> (i32, i32) {
    %c0_i32 = arith.constant 0 : i32
    %c0_i32_0 = arith.constant 0 : i32
    %c0_i32_1 = arith.constant 0 : i32
    return %c0_i32, %c0_i32_0 : i32, i32
  }
  func.func @transform_2(%arg0: i32) -> (i32, i32) {
    %c0_i32 = arith.constant 0 : i32
    %c0_i32_0 = arith.constant 0 : i32
    %c0_i32_1 = arith.constant 0 : i32
    return %c0_i32, %c0_i32_0 : i32, i32
  }
  func.func @transform_3(%arg0: i32) -> (i32, i32) {
    %c0_i32 = arith.constant 0 : i32
    %c0_i32_0 = arith.constant 0 : i32
    %c0_i32_1 = arith.constant 0 : i32
    return %c0_i32, %c0_i32_0 : i32, i32
  }
  func.func @transform_4(%arg0: i32) -> (i32, i32) {
    %c0_i32 = arith.constant 0 : i32
    %c0_i32_0 = arith.constant 0 : i32
    %c0_i32_1 = arith.constant 0 : i32
    return %c0_i32, %c0_i32_0 : i32, i32
  }
  func.func @transform_5(%arg0: i32) -> (i32, i32) {
    %c0_i32 = arith.constant 0 : i32
    %c0_i32_0 = arith.constant 0 : i32
    return %arg0, %c0_i32 : i32, i32
  }
}

</mosaic_0001>

<llo_original>
// kernel: tpu_custom_call.1
$region0: #{tpu_custom_call.1}
  #allocation0 [shape = 'u32[]', space=smem, size = 0x4, offset = 0x4, fixed_abs, tag = 'smem constant byte address 0x4 - core index']
  #allocation1 [shape = 'u32[144,128]{1,0:T(1,128)}', space=vmem, size = 0x12000, scoped, tag = 'internal scratch']
  %s0 = inlined_call_operand.hbm [shape: f32[2,16], index: 0, kind: input, shape index: {}]
  %s1 = inlined_call_operand.hbm [shape: f32[16,384], index: 1, kind: input, shape index: {}]
  %s2 = inlined_call_operand.vmem [shape: f32[1,384], index: 2, kind: input, shape index: {}]
  %s3 = inlined_call_operand.hbm [shape: f32[128,128], index: 3, kind: input, shape index: {}]
  %s4 = inlined_call_operand.vmem [shape: f32[1,128], index: 4, kind: input, shape index: {}]
  %s5 = inlined_call_operand.hbm [shape: f32[2,128], index: 5, kind: output, shape index: {}]
  %s6 = sld [smem:[#allocation0]]
  $region42: #{tpu_custom_call.1} parent=0
    _
  %s8 = ssub.s32 1, %s6
  %s9 = scalar_select 0, %s8, %s6
  $region1: #{tpu_custom_call.1} parent=0
    #allocation2 [shape = 'u8[1024]{0}', space=vmem, size = 0x400, scoped, tag = 'input window, operand 0, single buffered']
    #allocation3 [shape = 's32[1]{0}', space=sflag, size = 0x4, scoped, tag = 'scoped memory for tpu_custom_call.1']
    #allocation4 [shape = 's32[1]{0}', space=sflag, size = 0x4, scoped, tag = 'scoped memory for tpu_custom_call.1']
    #allocation5 [shape = 'u8[24576]{0}', space=vmem, size = 0x6000, scoped, tag = 'input window, operand 1, single buffered']
    #allocation6 [shape = 's32[1]{0}', space=sflag, size = 0x4, scoped, tag = 'scoped memory for tpu_custom_call.1']
    #allocation7 [shape = 'u8[65536]{0}', space=vmem, size = 0x10000, scoped, tag = 'input window, operand 3, single buffered']
    #allocation8 [shape = 'u8[1024]{0}', space=vmem, size = 0x400, scoped, tag = 'output window, operand 0, single buffered']
    %10 = vsyncpa [#allocation3], 0
    %11 = vsyncpa [#allocation6], 0
    %12 = vsyncpa [#allocation4], 0
    // Predicated region
    $region2: #{tpu_custom_call.1} parent=1 // pred_check
      _
    $region3: #{tpu_custom_call.1} parent=1 // pred_check_branch
      %14 = sbr.rel (0) target = $region5
    $region4: #{tpu_custom_call.1} parent=1 // pred_region
      %s16 = ssub.s32 32, 32
      %17 = vsyncadd [#allocation3], %s16
      %s19 = sshll.u32 [#allocation2], 4
      %s20 = int_to_ptr.vmem [resolvable:$true] %s19
      %22 = dma.hbm_to_vmem [thread:$0]  %s0, 32, %s20, [#allocation3]
    $region5: #{tpu_custom_call.1} parent=1 // pred_fallthru
      _
    // Predicated region
    $region6: #{tpu_custom_call.1} parent=1 // pred_check
      _
    $region7: #{tpu_custom_call.1} parent=1 // pred_check_branch
      %24 = sbr.rel (0) target = $region9
    $region8: #{tpu_custom_call.1} parent=1 // pred_region
      %s26 = ssub.s32 768, 768
      %27 = vsyncadd [#allocation6], %s26
      %s28 = sshll.u32 [#allocation5], 4
      %s29 = int_to_ptr.vmem [resolvable:$true] %s28
      %34 = dma.hbm_to_vmem [thread:$0]  %s1, 768, %s29, [#allocation6], 384, 384, 24
    $region9: #{tpu_custom_call.1} parent=1 // pred_fallthru
      _
    // Predicated region
    $region10: #{tpu_custom_call.1} parent=1 // pred_check
      _
    $region11: #{tpu_custom_call.1} parent=1 // pred_check_branch
      %36 = sbr.rel (0) target = $region13
    $region12: #{tpu_custom_call.1} parent=1 // pred_region
      _
    $region13: #{tpu_custom_call.1} parent=1 // pred_fallthru
      _
    // Predicated region
    $region14: #{tpu_custom_call.1} parent=1 // pred_check
      _
    $region15: #{tpu_custom_call.1} parent=1 // pred_check_branch
      %38 = sbr.rel (0) target = $region17
    $region16: #{tpu_custom_call.1} parent=1 // pred_region
      %s40 = ssub.s32 2048, 2048
      %41 = vsyncadd [#allocation6], %s40
      %s42 = sshll.u32 [#allocation7], 4
      %s43 = int_to_ptr.vmem [resolvable:$true] %s42
      %48 = dma.hbm_to_vmem [thread:$0]  %s3, 2048, %s43, [#allocation6], 128, 128, 8
    $region17: #{tpu_custom_call.1} parent=1 // pred_fallthru
      _
    // Predicated region
    $region18: #{tpu_custom_call.1} parent=1 // pred_check
      _
    $region19: #{tpu_custom_call.1} parent=1 // pred_check_branch
      %50 = sbr.rel (0) target = $region21
    $region20: #{tpu_custom_call.1} parent=1 // pred_region
      _
    $region21: #{tpu_custom_call.1} parent=1 // pred_fallthru
      _
    // Predicated region
    $region22: #{tpu_custom_call.1} parent=1 // pred_check
      _
    $region23: #{tpu_custom_call.1} parent=1 // pred_check_branch
      %52 = sbr.rel (0) target = $region25
    $region24: #{tpu_custom_call.1} parent=1 // pred_region
      %53 = dma.done [#allocation3], 32
    $region25: #{tpu_custom_call.1} parent=1 // pred_fallthru
      _
    // Predicated region
    $region26: #{tpu_custom_call.1} parent=1 // pred_check
      _
    $region27: #{tpu_custom_call.1} parent=1 // pred_check_branch
      %55 = sbr.rel (0) target = $region29
    $region28: #{tpu_custom_call.1} parent=1 // pred_region
      %56 = dma.done [#allocation6], 768
    $region29: #{tpu_custom_call.1} parent=1 // pred_fallthru
      _
    // Predicated region
    $region30: #{tpu_custom_call.1} parent=1 // pred_check
      _
    $region31: #{tpu_custom_call.1} parent=1 // pred_check_branch
      %58 = sbr.rel (0) target = $region33
    $region32: #{tpu_custom_call.1} parent=1 // pred_region
      %59 = dma.done [#allocation6], 2048
    $region33: #{tpu_custom_call.1} parent=1 // pred_fallthru
      _
    %v60 = vld [vmem:[#allocation2] sm:$0x3]
    %v61 = vld [vmem:[#allocation5] sm:$0xff]
    %v62 = vld [vmem:[#allocation5 + $0x8] sm:$0xff]
    %v63 = vld [vmem:[#allocation5 + $0x10] sm:$0xff]
    %v64 = vld [vmem:[#allocation5 + $0x18] sm:$0xff]
    %v65 = vld [vmem:[#allocation5 + $0x20] sm:$0xff]
    %v66 = vld [vmem:[#allocation5 + $0x28] sm:$0xff]
    %v67 = vld [vmem:[%s2] sm:$0x7]
    %v69 = vlaneseq
    %v70 = vshrl.u32 %v69, 7
    %v71 = vsub.s32 0, %v70
    %v72 = vrot.slane %v67, %v71
    %v73 = vlaneseq
    %v74 = vshrl.u32 %v73, 7
    %v75 = vsub.s32 1, %v74
    %v76 = vrot.slane %v67, %v75
    %v77 = vlaneseq
    %v78 = vshrl.u32 %v77, 7
    %v79 = vsub.s32 2, %v78
    %v80 = vrot.slane %v67, %v79
    %vm84 = vcmask 130048
    %v86 = vsel %vm84, %v60, 0
    %88 = vmatprep.subr.mxu0 %v62
    %89 = vmatpush1.msra.mxu0 %v61
    %90 = vmatprep.subr.mxu0 %v65
    %91 = vmatpush1.msra.mxu0 %v64
    %92 = vmatprep.subr.mxu0 0.0
    %93 = vmatpush1.msra.mxu0 0.0
    %94 = vmatprep.subr.mxu0 0.0
    %95 = vmatpush1.msra.mxu0 0.0
    %96 = vmatprep.subr.mxu0 0.0
    %97 = vmatpush1.msra.mxu0 0.0
    %98 = vmatprep.subr.mxu0 0.0
    %99 = vmatpush1.msra.mxu0 0.0
    %100 = vmatprep.subr.mxu0 0.0
    %101 = vmatpush1.msra.mxu0 0.0
    %102 = vmatprep.subr.mxu0 0.0
    %103 = vmatpush1.msra.mxu0 0.0
    %104 = vmatprep.subr.mxu0 0.0
    %105 = vmatpush1.msra.mxu0 0.0
    %106 = vmatprep.subr.mxu0 0.0
    %107 = vmatpush1.msra.mxu0 0.0
    %108 = vmatprep.subr.mxu0 0.0
    %109 = vmatpush1.msra.mxu0 0.0
    %110 = vmatprep.subr.mxu0 0.0
    %111 = vmatpush1.msra.mxu0 0.0
    %112 = vmatprep.subr.mxu0 0.0
    %113 = vmatpush1.msra.mxu0 0.0
    %114 = vmatprep.subr.mxu0 0.0
    %115 = vmatpush1.msra.mxu0 0.0
    %116 = vmatprep.subr.mxu0 0.0
    %117 = vmatpush1.msra.mxu0 0.0
    %118 = vmatprep.subr.mxu0 0.0
    %119 = vmatpush1.msra.mxu0 0.0
    %120 = vmatprep.subr.mxu0 0.0
    %121 = vmatpush1.msra.mxu0 0.0
    %122 = vmatprep.subr.mxu0 0.0
    %123 = vmatpush1.msra.mxu0 0.0
    %124 = vmatprep.subr.mxu0 0.0
    %125 = vmatpush1.msra.mxu0 0.0
    %126 = vmatprep.subr.mxu0 0.0
    %127 = vmatpush1.msra.mxu0 0.0
    %128 = vmatprep.subr.mxu0 0.0
    %129 = vmatpush1.msra.mxu0 0.0
    %130 = vmatprep.subr.mxu0 0.0
    %131 = vmatpush1.msra.mxu0 0.0
    %132 = vmatprep.subr.mxu0 0.0
    %133 = vmatpush1.msra.mxu0 0.0
    %134 = vmatprep.subr.mxu0 0.0
    %135 = vmatpush1.msra.mxu0 0.0
    %136 = vmatprep.subr.mxu0 0.0
    %137 = vmatpush1.msra.mxu0 0.0
    %138 = vmatprep.subr.mxu0 0.0
    %139 = vmatpush1.msra.mxu0 0.0
    %140 = vmatprep.subr.mxu0 0.0
    %141 = vmatpush1.msra.mxu0 0.0
    %142 = vmatprep.subr.mxu0 0.0
    %143 = vmatpush1.msra.mxu0 0.0
    %144 = vmatprep.subr.mxu0 0.0
    %145 = vmatpush1.msra.mxu0 0.0
    %146 = vmatprep.subr.mxu0 0.0
    %147 = vmatpush1.msra.mxu0 0.0
    %148 = vmatprep.subr.mxu0 0.0
    %149 = vmatpush1.msra.mxu0 0.0
    %150 = vmatprep.subr.mxu0 0.0
    %151 = vmatpush1.msra.mxu0 0.0
    %152 = vmatprep.mubr.f32.mxu0 0.0
    %153 = vmatmul.mubr.f32.gmra.mrb[0].mxu0 %v86
    %v154 = vpop.f32.mrb[0].mxu0
    %v155 = vadd.f32 %v72, %v154
    %v156 = vpop.f32.mrb[0].mxu0
    %v157 = vadd.f32 %v76, %v156
    %158 = vdwg.mxu0
    %159 = vmatprep.subr.mxu0 0.0
    %160 = vmatpush1.msra.mxu0 %v63
    %161 = vmatprep.subr.mxu0 0.0
    %162 = vmatpush1.msra.mxu0 %v66
    %163 = vmatprep.subr.mxu0 0.0
    %164 = vmatpush1.msra.mxu0 0.0
    %165 = vmatprep.subr.mxu0 0.0
    %166 = vmatpush1.msra.mxu0 0.0
    %167 = vmatprep.subr.mxu0 0.0
    %168 = vmatpush1.msra.mxu0 0.0
    %169 = vmatprep.subr.mxu0 0.0
    %170 = vmatpush1.msra.mxu0 0.0
    %171 = vmatprep.subr.mxu0 0.0
    %172 = vmatpush1.msra.mxu0 0.0
    %173 = vmatprep.subr.mxu0 0.0
    %174 = vmatpush1.msra.mxu0 0.0
    %175 = vmatprep.subr.mxu0 0.0
    %176 = vmatpush1.msra.mxu0 0.0
    %177 = vmatprep.subr.mxu0 0.0
    %178 = vmatpush1.msra.mxu0 0.0
    %179 = vmatprep.subr.mxu0 0.0
    %180 = vmatpush1.msra.mxu0 0.0
    %181 = vmatprep.subr.mxu0 0.0
    %182 = vmatpush1.msra.mxu0 0.0
    %183 = vmatprep.subr.mxu0 0.0
    %184 = vmatpush1.msra.mxu0 0.0
    %185 = vmatprep.subr.mxu0 0.0
    %186 = vmatpush1.msra.mxu0 0.0
    %187 = vmatprep.subr.mxu0 0.0
    %188 = vmatpush1.msra.mxu0 0.0
    %189 = vmatprep.subr.mxu0 0.0
    %190 = vmatpush1.msra.mxu0 0.0
    %191 = vmatprep.subr.mxu0 0.0
    %192 = vmatpush1.msra.mxu0 0.0
    %193 = vmatprep.subr.mxu0 0.0
    %194 = vmatpush1.msra.mxu0 0.0
    %195 = vmatprep.subr.mxu0 0.0
    %196 = vmatpush1.msra.mxu0 0.0
    %197 = vmatprep.subr.mxu0 0.0
    %198 = vmatpush1.msra.mxu0 0.0
    %199 = vmatprep.subr.mxu0 0.0
    %200 = vmatpush1.msra.mxu0 0.0
    %201 = vmatprep.subr.mxu0 0.0
    %202 = vmatpush1.msra.mxu0 0.0
    %203 = vmatprep.subr.mxu0 0.0
    %204 = vmatpush1.msra.mxu0 0.0
    %205 = vmatprep.subr.mxu0 0.0
    %206 = vmatpush1.msra.mxu0 0.0
    %207 = vmatprep.subr.mxu0 0.0
    %208 = vmatpush1.msra.mxu0 0.0
    %209 = vmatprep.subr.mxu0 0.0
    %210 = vmatpush1.msra.mxu0 0.0
    %211 = vmatprep.subr.mxu0 0.0
    %212 = vmatpush1.msra.mxu0 0.0
    %213 = vmatprep.subr.mxu0 0.0
    %214 = vmatpush1.msra.mxu0 0.0
    %215 = vmatprep.subr.mxu0 0.0
    %216 = vmatpush1.msra.mxu0 0.0
    %217 = vmatprep.subr.mxu0 0.0
    %218 = vmatpush1.msra.mxu0 0.0
    %219 = vmatprep.subr.mxu0 0.0
    %220 = vmatpush1.msra.mxu0 0.0
    %221 = vmatprep.subr.mxu0 0.0
    %222 = vmatpush1.msra.mxu0 0.0
    %223 = vmatprep.mubr.f32.mxu0 0.0
    %224 = vmatmul.mubr.f32.gmra.mrb[0].mxu0 %v86
    %v225 = vpop.f32.mrb[0].mxu0
    %v226 = vadd.f32 %v80, %v225
    %v227 = vpop.f32.mrb[0].mxu0
    %228 = vdwg.mxu0
    %v229 = vxor.u32 %v155, 2147483648
    %v230 = vxor.u32 %v157, 2147483648
    %v231 = vxor.u32 %v226, 2147483648
    %v232 = vmul.f32 %v229, 1.442695
    %v233 = vpow.pop %v232
    %v234 = vmul.f32 %v230, 1.442695
    %v235 = vpow.pop %v234
    %v236 = vmul.f32 %v231, 1.442695
    %v237 = vpow.pop %v236
    %v238 = vadd.f32 %v233, 1.0
    %v239 = vadd.f32 %v235, 1.0
    %v240 = vadd.f32 %v237, 1.0
    %v241 = vrcp.pop %v238
    %v242 = vmul.f32 1.0, %v241
    %v243 = vrcp.pop %v239
    %v244 = vmul.f32 1.0, %v243
    %v245 = vrcp.pop %v240
    %v246 = vmul.f32 1.0, %v245
    %v247 = vmul.f32 %v246, 2.0
    %v248 = vsub.f32 %v247, 1.0
    %v249 = vmul.f32 %v242, %v248
    %v250 = vtanh.pop %v249
    %v251 = vmul.f32 %v244, %v250
    %v252 = vld [vmem:[#allocation7] sm:$0xff]
    %v253 = vld [vmem:[#allocation7 + $0x8] sm:$0xff]
    %v254 = vld [vmem:[#allocation7 + $0x10] sm:$0xff]
    %v255 = vld [vmem:[#allocation7 + $0x18] sm:$0xff]
    %v256 = vld [vmem:[#allocation7 + $0x20] sm:$0xff]
    %v257 = vld [vmem:[#allocation7 + $0x28] sm:$0xff]
    %v258 = vld [vmem:[#allocation7 + $0x30] sm:$0xff]
    %v259 = vld [vmem:[#allocation7 + $0x38] sm:$0xff]
    %v260 = vld [vmem:[#allocation7 + $0x40] sm:$0xff]
    %v261 = vld [vmem:[#allocation7 + $0x48] sm:$0xff]
    %v262 = vld [vmem:[#allocation7 + $0x50] sm:$0xff]
    %v263 = vld [vmem:[#allocation7 + $0x58] sm:$0xff]
    %v264 = vld [vmem:[#allocation7 + $0x60] sm:$0xff]
    %v265 = vld [vmem:[#allocation7 + $0x68] sm:$0xff]
    %v266 = vld [vmem:[#allocation7 + $0x70] sm:$0xff]
    %v267 = vld [vmem:[#allocation7 + $0x78] sm:$0xff]
    %v268 = vld [vmem:[%s4] sm:$0x1]
    %v270 = vlaneseq
    %v271 = vshrl.u32 %v270, 7
    %v272 = vsub.s32 0, %v271
    %v273 = vrot.slane %v268, %v272
    %275 = vmatprep.subr.mxu0 0.0
    %276 = vmatpush1.msra.mxu0 %v252
    %277 = vmatprep.subr.mxu0 0.0
    %278 = vmatpush1.msra.mxu0 %v253
    %279 = vmatprep.subr.mxu0 0.0
    %280 = vmatpush1.msra.mxu0 %v254
    %281 = vmatprep.subr.mxu0 0.0
    %282 = vmatpush1.msra.mxu0 %v255
    %283 = vmatprep.subr.mxu0 0.0
    %284 = vmatpush1.msra.mxu0 %v256
    %285 = vmatprep.subr.mxu0 0.0
    %286 = vmatpush1.msra.mxu0 %v257
    %287 = vmatprep.subr.mxu0 0.0
    %288 = vmatpush1.msra.mxu0 %v258
    %289 = vmatprep.subr.mxu0 0.0
    %290 = vmatpush1.msra.mxu0 %v259
    %291 = vmatprep.subr.mxu0 0.0
    %292 = vmatpush1.msra.mxu0 %v260
    %293 = vmatprep.subr.mxu0 0.0
    %294 = vmatpush1.msra.mxu0 %v261
    %295 = vmatprep.subr.mxu0 0.0
    %296 = vmatpush1.msra.mxu0 %v262
    %297 = vmatprep.subr.mxu0 0.0
    %298 = vmatpush1.msra.mxu0 %v263
    %299 = vmatprep.subr.mxu0 0.0
    %300 = vmatpush1.msra.mxu0 %v264
    %301 = vmatprep.subr.mxu0 0.0
    %302 = vmatpush1.msra.mxu0 %v265
    %303 = vmatprep.subr.mxu0 0.0
    %304 = vmatpush1.msra.mxu0 %v266
    %305 = vmatprep.subr.mxu0 0.0
    %306 = vmatpush1.msra.mxu0 %v267
    %307 = vmatprep.subr.mxu0 0.0
    %308 = vmatpush1.msra.mxu0 0.0
    %309 = vmatprep.subr.mxu0 0.0
    %310 = vmatpush1.msra.mxu0 0.0
    %311 = vmatprep.subr.mxu0 0.0
    %312 = vmatpush1.msra.mxu0 0.0
    %313 = vmatprep.subr.mxu0 0.0
    %314 = vmatpush1.msra.mxu0 0.0
    %315 = vmatprep.subr.mxu0 0.0
    %316 = vmatpush1.msra.mxu0 0.0
    %317 = vmatprep.subr.mxu0 0.0
    %318 = vmatpush1.msra.mxu0 0.0
    %319 = vmatprep.subr.mxu0 0.0
    %320 = vmatpush1.msra.mxu0 0.0
    %321 = vmatprep.subr.mxu0 0.0
    %322 = vmatpush1.msra.mxu0 0.0
    %323 = vmatprep.subr.mxu0 0.0
    %324 = vmatpush1.msra.mxu0 0.0
    %325 = vmatprep.subr.mxu0 0.0
    %326 = vmatpush1.msra.mxu0 0.0
    %327 = vmatprep.subr.mxu0 0.0
    %328 = vmatpush1.msra.mxu0 0.0
    %329 = vmatprep.subr.mxu0 0.0
    %330 = vmatpush1.msra.mxu0 0.0
    %331 = vmatprep.subr.mxu0 0.0
    %332 = vmatpush1.msra.mxu0 0.0
    %333 = vmatprep.subr.mxu0 0.0
    %334 = vmatpush1.msra.mxu0 0.0
    %335 = vmatprep.subr.mxu0 0.0
    %336 = vmatpush1.msra.mxu0 0.0
    %337 = vmatprep.subr.mxu0 0.0
    %338 = vmatpush1.msra.mxu0 0.0
    %339 = vmatprep.mubr.f32.mxu0 0.0
    %340 = vmatmul.mubr.f32.gmra.mrb[0].mxu0 %v251
    %v341 = vpop.f32.mrb[0].mxu0
    %v342 = vadd.f32 %v273, %v341
    %v343 = vpop.f32.mrb[0].mxu0
    %344 = vdwg.mxu0
    %345 = vst [vmem:[#allocation8] sm:$0x3] %v342
    // Predicated region
    $region34: #{tpu_custom_call.1} parent=1 // pred_check
      _
    $region35: #{tpu_custom_call.1} parent=1 // pred_check_branch
      %347 = sbr.rel (0) target = $region37
    $region36: #{tpu_custom_call.1} parent=1 // pred_region
      %s349 = ssub.s32 32, 32
      %350 = vsyncadd [#allocation4], %s349
      %s352 = sshll.u32 [#allocation8], 4
      %s353 = int_to_ptr.vmem [resolvable:$true] %s352
      %355 = dma.vmem_to_hbm [thread:$0]  %s353, 32, %s5, [#allocation4]
    $region37: #{tpu_custom_call.1} parent=1 // pred_fallthru
      _
    // Predicated region
    $region38: #{tpu_custom_call.1} parent=1 // pred_check
      _
    $region39: #{tpu_custom_call.1} parent=1 // pred_check_branch
      %357 = sbr.rel (0) target = $region41
    $region40: #{tpu_custom_call.1} parent=1 // pred_region
      %358 = dma.done [#allocation4], 32
    $region41: #{tpu_custom_call.1} parent=1 // pred_fallthru
      _
    %359 = vsyncpa [#allocation3], 1
    %360 = vsyncpa [#allocation6], 1
    %361 = vsyncpa [#allocation4], 1

</llo_original>
